<compile_context>
chip_gen: v7x
topology: tpu7x:2x2x1
jax: 0.10.0
libtpu: 0.0.40
codegen_flags: <defaults>
</compile_context>

<pallas_src>
import functools

import jax
import jax.numpy as jnp
from jax.experimental import pallas as pl
from jax.experimental.pallas import tpu as pltpu


def _round_up(x, m):
    return ((x + m - 1) // m) * m


def _device_vmem_bytes():
    """Physical VMEM per TensorCore; conservative fallback = v7x's 64 MiB."""
    try:
        info = pltpu.get_tpu_info()
        cap = getattr(info, "vmem_capacity_bytes", None)
        if cap:
            return int(cap)
    except Exception:
        pass
    return 64 * 1024 * 1024


def _pick_ch_chunk(C):
    """Channel chunk for in-kernel pooling (bounds the fp32 transient)."""
    if C <= 512:
        return C
    for cand in (512, 384, 256, 128):
        if C % cand == 0:
            return cand
    return C


def _pick_b_tile(B, b_target):
    """Largest batch tile that (a) fits VMEM, (b) divides B, (c) is a
    multiple of 8 or equals B (8,128 block rule); prefer grid extent >= 2
    so the second TensorCore on v7x gets work."""
    cands = [d for d in range(8, B + 1, 8) if B % d == 0]
    if B not in cands:
        cands.append(B)
    cands = sorted(set(cands))
    ok = [d for d in cands if d <= b_target]
    if ok:
        pref = [d for d in ok if B // d >= 2]
        return (pref[-1] if pref else ok[-1]), False
    # Nothing legal fits VMEM: pad B up to a multiple of a fitting tile.
    bt = max(8, (max(b_target, 1) // 8) * 8)
    return bt, True


def _pool_map_kernel(feat_ref, wt_ref, out_ref, *, ch_chunk):
    """One batch-tile step: global spatial sum + gamma/HW-scaled linear map.

    feat_ref: (b_tile, C, HW)    feature-map tile, native dtype (NCHW layout)
    wt_ref:   (C, OUT_pad) f32   weight, pre-scaled by gamma / HW, resident
    out_ref:  (b_tile, OUT_pad) f32
    """
    b_tile, C, _ = feat_ref.shape
    out_pad = out_ref.shape[1]

    acc = jnp.zeros((b_tile, out_pad), jnp.float32)
    # Channel-chunked so the fp32 upcast transient is one chunk, not full C.
    for lo in range(0, C, ch_chunk):
        chunk = feat_ref[:, lo:lo + ch_chunk, :]                      # native dtype
        pooled = jnp.sum(chunk.astype(jnp.float32), axis=-1)          # (b_tile, ch)
        acc = acc + jnp.dot(pooled, wt_ref[lo:lo + ch_chunk, :],
                            preferred_element_type=jnp.float32)
    out_ref[...] = acc


def pspace_forward(feat_nchw, mapper_weight, logscaling, *, b_tile=None):
    """Fused global-avg-pool + gamma-scaled linear map.

    feat_nchw:     (B, C, H, W)  feature maps entering ResNet50's avgpool
                                 (any float dtype; streamed as-is, no upcast)
    mapper_weight: (OUT, C)      raw checkpoint weight `linear0.weight`
    logscaling:    scalar        `param_logscaling`
    returns:       (B, OUT) float32
    """
    B, C, H, W = feat_nchw.shape
    OUT = mapper_weight.shape[0]
    assert mapper_weight.shape[1] == C
    hw = H * W

    # Fold gamma = exp(logscaling) AND the 1/HW pooling factor into the weight.
    gamma = jnp.exp(logscaling).astype(jnp.float32)
    wt = (mapper_weight.astype(jnp.float32) * (gamma / jnp.float32(hw))).T   # (C, OUT)

    # Pad OUT to a full 128-lane width (unmasked vst); slice back afterwards.
    out_pad = _round_up(OUT, 128)
    if out_pad != OUT:
        wt = jnp.pad(wt, ((0, 0), (0, out_pad - OUT)))

    # Consume NCHW directly as (B, C, HW): a free reshape, no transpose pass.
    feat = feat_nchw.reshape(B, C, hw)
    itemsize = jnp.dtype(feat.dtype).itemsize

    ch_chunk = _pick_ch_chunk(C)

    # ---- VMEM accounting (includes sublane/lane padding + fp32 temps) ------
    vmem_cap = _device_vmem_bytes()
    sub = max(8, 32 // itemsize)                     # sublane packing unit
    lane_hw = _round_up(hw, 128)                     # HW sits on lanes (padded)
    feat_row = _round_up(C, sub) * lane_hw * itemsize     # per batch-row block
    cast_tmp_row = ch_chunk * lane_hw * 4                 # fp32 upcast transient
    pooled_row = _round_up(ch_chunk, 128) * 4
    acc_row = out_pad * 4
    out_row = 2 * out_pad * 4                              # double-buffered out
    per_row = 2 * feat_row + cast_tmp_row + pooled_row + acc_row + out_row
    w_bytes = 2 * _round_up(C, 8) * out_pad * 4            # weight (conservative 2x)

    budget = int(vmem_cap * 0.75)
    b_target = max(1, (budget - w_bytes) // per_row)

    if b_tile is None:
        b_tile, _ = _pick_b_tile(B, b_target)

    B_pad = _round_up(B, b_tile)
    if B_pad != B:
        feat = jnp.pad(feat, ((0, B_pad - B), (0, 0), (0, 0)))

    est_total = w_bytes + b_tile * per_row
    vmem_limit = min(vmem_cap, max(32 << 20, est_total + (4 << 20)))

    grid_spec = pltpu.PrefetchScalarGridSpec(
        num_scalar_prefetch=0,
        grid=(B_pad // b_tile,),
        in_specs=[
            # Features: full-C, full-HW block per batch tile.
            pl.BlockSpec((b_tile, C, hw), lambda b: (b, 0, 0)),
            # Weight: constant block index -> DMA'd once, resident in VMEM.
            pl.BlockSpec((C, out_pad), lambda b: (0, 0)),
        ],
        out_specs=pl.BlockSpec((b_tile, out_pad), lambda b: (b, 0)),
    )

    cost = pl.CostEstimate(
        flops=int(B_pad * C * hw + 2 * B_pad * C * out_pad),
        transcendentals=0,
        bytes_accessed=int(B_pad * C * hw * itemsize
                           + C * out_pad * 4
                           + B_pad * out_pad * 4),
    )

    out_full = pl.pallas_call(
        functools.partial(_pool_map_kernel, ch_chunk=ch_chunk),
        out_shape=jax.ShapeDtypeStruct((B_pad, out_pad), jnp.float32),
        grid_spec=grid_spec,
        compiler_params=pltpu.CompilerParams(
            dimension_semantics=("parallel",),   # batch tiles are independent
            vmem_limit_bytes=int(vmem_limit),
        ),
        cost_estimate=cost,
    )(feat, wt)

    return out_full[:B, :OUT]


def pspace_reference(feat_nchw, mapper_weight, logscaling):
    """Pure-JAX reference of the same forward."""
    B, C, H, W = feat_nchw.shape
    gamma = jnp.exp(logscaling)
    pooled = jnp.mean(
        feat_nchw.astype(jnp.float32).reshape(B, C, H * W), axis=-1
    )  # (B, C) == avgpool output reshaped
    return pooled @ (mapper_weight.astype(jnp.float32) * gamma).T


if __name__ == "__main__":
    key = jax.random.PRNGKey(0)
    k_feat, k_w, k_ls = jax.random.split(key, 3)

    # Small synthetic shapes (real model: B x 2048 x 7 x 7 features, OUT from ckpt).
    B, C, H, W = 2, 256, 8, 8
    OUT = 32

    feat = jax.random.normal(k_feat, (B, C, H, W), dtype=jnp.float32)
    mapper_weight = jax.random.normal(k_w, (OUT, C), dtype=jnp.float32) * 0.02
    logscaling = jax.random.normal(k_ls, (), dtype=jnp.float32) * 0.1

    out = jax.block_until_ready(pspace_forward(feat, mapper_weight, logscaling))
    ref = pspace_reference(feat, mapper_weight, logscaling)

    assert out.shape == (B, OUT)
    err = jnp.max(jnp.abs(out - ref))
    assert jnp.allclose(out, ref, atol=2e-4, rtol=2e-4), f"max err {err}"
    print("KERNEL_OK")
</pallas_src>

<mosaic_0001>
module attributes {stable_mosaic.version = 11 : i64} {
  func.func @_pool_map_kernel(%arg0: i32, %arg1: memref<2x256x64xf32, #tpu.memory_space<vmem>>, %arg2: memref<256x128xf32, #tpu.memory_space<vmem>>, %arg3: memref<2x128xf32, #tpu.memory_space<vmem>>) attributes {dimension_semantics = [#tpu.dimension_semantics<parallel>], iteration_bounds = array<i64: 1>, scalar_prefetch = 0 : i64, scratch_operands = 0 : i64, tpu.core_type = #tpu.core_type<tc>, window_params = [{transform_indices = @transform_0, window_bounds = array<i64: 2, 256, 64>}, {pipeline_mode = #tpu.pipeline_mode<synchronous>, transform_indices = @transform_1, window_bounds = array<i64: 256, 128>}, {transform_indices = @transform_2, window_bounds = array<i64: 2, 128>}]} {
    %cst = arith.constant 0.000000e+00 : f32
    %0 = vector.broadcast %cst : f32 to vector<2x128xf32>
    %c0 = arith.constant 0 : index
    %c0_0 = arith.constant 0 : index
    %c0_1 = arith.constant 0 : index
    %1 = vector.load %arg1[%c0, %c0_0, %c0_1] : memref<2x256x64xf32, #tpu.memory_space<vmem>>, vector<2x256x64xf32>
    %cst_2 = arith.constant dense<0.000000e+00> : vector<2x256xf32>
    %2 = vector.multi_reduction <add>, %1, %cst_2 [2] : vector<2x256x64xf32> to vector<2x256xf32>
    %c0_3 = arith.constant 0 : index
    %c0_4 = arith.constant 0 : index
    %3 = vector.load %arg2[%c0_3, %c0_4] : memref<256x128xf32, #tpu.memory_space<vmem>>, vector<256x128xf32>
    %cst_5 = arith.constant dense<0.000000e+00> : vector<2x128xf32>
    %4 = tpu.matmul %2, %3, %cst_5 {dimension_numbers = #tpu.dot_dimension_numbers<[1], [0], [0], [1], [0, 0, 1, 1], [], []>} : vector<2x256xf32>, vector<256x128xf32>, vector<2x128xf32> -> vector<2x128xf32>
    %5 = arith.addf %0, %4 : vector<2x128xf32>
    %c0_6 = arith.constant 0 : index
    %c0_7 = arith.constant 0 : index
    %6 = vector.load %arg3[%c0_6, %c0_7] : memref<2x128xf32, #tpu.memory_space<vmem>>, vector<2x128xf32>
    tpu.vector_store %arg3[%c0_6, %c0_7], %5 {strides = array<i32>} : memref<2x128xf32, #tpu.memory_space<vmem>>, vector<2x128xf32>,
    return
  }
  func.func @transform_0(%arg0: i32) -> (i32, i32, i32) {
    %c0_i32 = arith.constant 0 : i32
    %c0_i32_0 = arith.constant 0 : i32
    %c0_i32_1 = arith.constant 0 : i32
    return %arg0, %c0_i32, %c0_i32_0 : i32, i32, i32
  }
  func.func @transform_1(%arg0: i32) -> (i32, i32) {
    %c0_i32 = arith.constant 0 : i32
    %c0_i32_0 = arith.constant 0 : i32
    %c0_i32_1 = arith.constant 0 : i32
    return %c0_i32, %c0_i32_0 : i32, i32
  }
  func.func @transform_2(%arg0: i32) -> (i32, i32) {
    %c0_i32 = arith.constant 0 : i32
    %c0_i32_0 = arith.constant 0 : i32
    return %arg0, %c0_i32 : i32, i32
  }
}

</mosaic_0001>

<llo_original>
// kernel: tpu_custom_call.1
$region0: #{tpu_custom_call.1}
  #allocation0 [shape = 'u32[]', space=smem, size = 0x4, offset = 0x4, fixed_abs, tag = 'smem constant byte address 0x4 - core index']
  #allocation1 [shape = 'u32[144,128]{1,0:T(1,128)}', space=vmem, size = 0x12000, scoped, tag = 'internal scratch']
  %s0 = inlined_call_operand.vmem [shape: f32[2,256,64], index: 0, kind: input, shape index: {}]
  %s1 = inlined_call_operand.vmem [shape: f32[256,128], index: 1, kind: input, shape index: {}]
  %s2 = inlined_call_operand.hbm [shape: f32[2,128], index: 2, kind: output, shape index: {}]
  %s3 = sld [smem:[#allocation0]]
  $region18: #{tpu_custom_call.1} parent=0
    _
  %s5 = ssub.s32 1, %s3
  %s6 = scalar_select 0, %s5, %s3
  $region1: #{tpu_custom_call.1} parent=0
    #allocation2 [shape = 'u8[1024]{0}', space=vmem, size = 0x400, scoped, tag = 'output window, operand 0, single buffered']
    #allocation3 [shape = 's32[1]{0}', space=sflag, size = 0x4, scoped, tag = 'scoped memory for tpu_custom_call.1']
    %7 = vsyncpa [#allocation3], 0
    // Predicated region
    $region2: #{tpu_custom_call.1} parent=1 // pred_check
      _
    $region3: #{tpu_custom_call.1} parent=1 // pred_check_branch
      %9 = sbr.rel (0) target = $region5
    $region4: #{tpu_custom_call.1} parent=1 // pred_region
      _
    $region5: #{tpu_custom_call.1} parent=1 // pred_fallthru
      _
    // Predicated region
    $region6: #{tpu_custom_call.1} parent=1 // pred_check
      _
    $region7: #{tpu_custom_call.1} parent=1 // pred_check_branch
      %11 = sbr.rel (0) target = $region9
    $region8: #{tpu_custom_call.1} parent=1 // pred_region
      _
    $region9: #{tpu_custom_call.1} parent=1 // pred_fallthru
      _
    %v12 = vld [vmem:[%s0] sm:$0xff]
    %v13 = vld [vmem:[%s0 + $0x8] sm:$0xff]
    %v14 = vld [vmem:[%s0 + $0x10] sm:$0xff]
    %v15 = vld [vmem:[%s0 + $0x18] sm:$0xff]
    %v16 = vld [vmem:[%s0 + $0x20] sm:$0xff]
    %v17 = vld [vmem:[%s0 + $0x28] sm:$0xff]
    %v18 = vld [vmem:[%s0 + $0x30] sm:$0xff]
    %v19 = vld [vmem:[%s0 + $0x38] sm:$0xff]
    %v20 = vld [vmem:[%s0 + $0x40] sm:$0xff]
    %v21 = vld [vmem:[%s0 + $0x48] sm:$0xff]
    %v22 = vld [vmem:[%s0 + $0x50] sm:$0xff]
    %v23 = vld [vmem:[%s0 + $0x58] sm:$0xff]
    %v24 = vld [vmem:[%s0 + $0x60] sm:$0xff]
    %v25 = vld [vmem:[%s0 + $0x68] sm:$0xff]
    %v26 = vld [vmem:[%s0 + $0x70] sm:$0xff]
    %v27 = vld [vmem:[%s0 + $0x78] sm:$0xff]
    %v28 = vld [vmem:[%s0 + $0x80] sm:$0xff]
    %v29 = vld [vmem:[%s0 + $0x88] sm:$0xff]
    %v30 = vld [vmem:[%s0 + $0x90] sm:$0xff]
    %v31 = vld [vmem:[%s0 + $0x98] sm:$0xff]
    %v32 = vld [vmem:[%s0 + $0xa0] sm:$0xff]
    %v33 = vld [vmem:[%s0 + $0xa8] sm:$0xff]
    %v34 = vld [vmem:[%s0 + $0xb0] sm:$0xff]
    %v35 = vld [vmem:[%s0 + $0xb8] sm:$0xff]
    %v36 = vld [vmem:[%s0 + $0xc0] sm:$0xff]
    %v37 = vld [vmem:[%s0 + $0xc8] sm:$0xff]
    %v38 = vld [vmem:[%s0 + $0xd0] sm:$0xff]
    %v39 = vld [vmem:[%s0 + $0xd8] sm:$0xff]
    %v40 = vld [vmem:[%s0 + $0xe0] sm:$0xff]
    %v41 = vld [vmem:[%s0 + $0xe8] sm:$0xff]
    %v42 = vld [vmem:[%s0 + $0xf0] sm:$0xff]
    %v43 = vld [vmem:[%s0 + $0xf8] sm:$0xff]
    %v44 = vld [vmem:[%s0 + $0x100] sm:$0xff]
    %v45 = vld [vmem:[%s0 + $0x108] sm:$0xff]
    %v46 = vld [vmem:[%s0 + $0x110] sm:$0xff]
    %v47 = vld [vmem:[%s0 + $0x118] sm:$0xff]
    %v48 = vld [vmem:[%s0 + $0x120] sm:$0xff]
    %v49 = vld [vmem:[%s0 + $0x128] sm:$0xff]
    %v50 = vld [vmem:[%s0 + $0x130] sm:$0xff]
    %v51 = vld [vmem:[%s0 + $0x138] sm:$0xff]
    %v52 = vld [vmem:[%s0 + $0x140] sm:$0xff]
    %v53 = vld [vmem:[%s0 + $0x148] sm:$0xff]
    %v54 = vld [vmem:[%s0 + $0x150] sm:$0xff]
    %v55 = vld [vmem:[%s0 + $0x158] sm:$0xff]
    %v56 = vld [vmem:[%s0 + $0x160] sm:$0xff]
    %v57 = vld [vmem:[%s0 + $0x168] sm:$0xff]
    %v58 = vld [vmem:[%s0 + $0x170] sm:$0xff]
    %v59 = vld [vmem:[%s0 + $0x178] sm:$0xff]
    %v60 = vld [vmem:[%s0 + $0x180] sm:$0xff]
    %v61 = vld [vmem:[%s0 + $0x188] sm:$0xff]
    %v62 = vld [vmem:[%s0 + $0x190] sm:$0xff]
    %v63 = vld [vmem:[%s0 + $0x198] sm:$0xff]
    %v64 = vld [vmem:[%s0 + $0x1a0] sm:$0xff]
    %v65 = vld [vmem:[%s0 + $0x1a8] sm:$0xff]
    %v66 = vld [vmem:[%s0 + $0x1b0] sm:$0xff]
    %v67 = vld [vmem:[%s0 + $0x1b8] sm:$0xff]
    %v68 = vld [vmem:[%s0 + $0x1c0] sm:$0xff]
    %v69 = vld [vmem:[%s0 + $0x1c8] sm:$0xff]
    %v70 = vld [vmem:[%s0 + $0x1d0] sm:$0xff]
    %v71 = vld [vmem:[%s0 + $0x1d8] sm:$0xff]
    %v72 = vld [vmem:[%s0 + $0x1e0] sm:$0xff]
    %v73 = vld [vmem:[%s0 + $0x1e8] sm:$0xff]
    %v74 = vld [vmem:[%s0 + $0x1f0] sm:$0xff]
    %v75 = vld [vmem:[%s0 + $0x1f8] sm:$0xff]
    %vm76 = vcmask 523264
    %v77 = vsel %vm76, %v12, 0.0
    %78 = vadd.xlane.f32.xlu0 %v77
    %v79 = vpop.xlane.xlu0 %78
    %v80 = vsel %vm76, %v13, 0.0
    %81 = vadd.xlane.f32.xlu0 %v80
    %v82 = vpop.xlane.xlu0 %81
    %v83 = vsel %vm76, %v14, 0.0
    %84 = vadd.xlane.f32.xlu0 %v83
    %v85 = vpop.xlane.xlu0 %84
    %v86 = vsel %vm76, %v15, 0.0
    %87 = vadd.xlane.f32.xlu0 %v86
    %v88 = vpop.xlane.xlu0 %87
    %v89 = vsel %vm76, %v16, 0.0
    %90 = vadd.xlane.f32.xlu0 %v89
    %v91 = vpop.xlane.xlu0 %90
    %v92 = vsel %vm76, %v17, 0.0
    %93 = vadd.xlane.f32.xlu0 %v92
    %v94 = vpop.xlane.xlu0 %93
    %v95 = vsel %vm76, %v18, 0.0
    %96 = vadd.xlane.f32.xlu0 %v95
    %v97 = vpop.xlane.xlu0 %96
    %v98 = vsel %vm76, %v19, 0.0
    %99 = vadd.xlane.f32.xlu0 %v98
    %v100 = vpop.xlane.xlu0 %99
    %v101 = vsel %vm76, %v20, 0.0
    %102 = vadd.xlane.f32.xlu0 %v101
    %v103 = vpop.xlane.xlu0 %102
    %v104 = vsel %vm76, %v21, 0.0
    %105 = vadd.xlane.f32.xlu0 %v104
    %v106 = vpop.xlane.xlu0 %105
    %v107 = vsel %vm76, %v22, 0.0
    %108 = vadd.xlane.f32.xlu0 %v107
    %v109 = vpop.xlane.xlu0 %108
    %v110 = vsel %vm76, %v23, 0.0
    %111 = vadd.xlane.f32.xlu0 %v110
    %v112 = vpop.xlane.xlu0 %111
    %v113 = vsel %vm76, %v24, 0.0
    %114 = vadd.xlane.f32.xlu0 %v113
    %v115 = vpop.xlane.xlu0 %114
    %v116 = vsel %vm76, %v25, 0.0
    %117 = vadd.xlane.f32.xlu0 %v116
    %v118 = vpop.xlane.xlu0 %117
    %v119 = vsel %vm76, %v26, 0.0
    %120 = vadd.xlane.f32.xlu0 %v119
    %v121 = vpop.xlane.xlu0 %120
    %v122 = vsel %vm76, %v27, 0.0
    %123 = vadd.xlane.f32.xlu0 %v122
    %v124 = vpop.xlane.xlu0 %123
    %v125 = vsel %vm76, %v28, 0.0
    %126 = vadd.xlane.f32.xlu0 %v125
    %v127 = vpop.xlane.xlu0 %126
    %v128 = vsel %vm76, %v29, 0.0
    %129 = vadd.xlane.f32.xlu0 %v128
    %v130 = vpop.xlane.xlu0 %129
    %v131 = vsel %vm76, %v30, 0.0
    %132 = vadd.xlane.f32.xlu0 %v131
    %v133 = vpop.xlane.xlu0 %132
    %v134 = vsel %vm76, %v31, 0.0
    %135 = vadd.xlane.f32.xlu0 %v134
    %v136 = vpop.xlane.xlu0 %135
    %v137 = vsel %vm76, %v32, 0.0
    %138 = vadd.xlane.f32.xlu0 %v137
    %v139 = vpop.xlane.xlu0 %138
    %v140 = vsel %vm76, %v33, 0.0
    %141 = vadd.xlane.f32.xlu0 %v140
    %v142 = vpop.xlane.xlu0 %141
    %v143 = vsel %vm76, %v34, 0.0
    %144 = vadd.xlane.f32.xlu0 %v143
    %v145 = vpop.xlane.xlu0 %144
    %v146 = vsel %vm76, %v35, 0.0
    %147 = vadd.xlane.f32.xlu0 %v146
    %v148 = vpop.xlane.xlu0 %147
    %v149 = vsel %vm76, %v36, 0.0
    %150 = vadd.xlane.f32.xlu0 %v149
    %v151 = vpop.xlane.xlu0 %150
    %v152 = vsel %vm76, %v37, 0.0
    %153 = vadd.xlane.f32.xlu0 %v152
    %v154 = vpop.xlane.xlu0 %153
    %v155 = vsel %vm76, %v38, 0.0
    %156 = vadd.xlane.f32.xlu0 %v155
    %v157 = vpop.xlane.xlu0 %156
    %v158 = vsel %vm76, %v39, 0.0
    %159 = vadd.xlane.f32.xlu0 %v158
    %v160 = vpop.xlane.xlu0 %159
    %v161 = vsel %vm76, %v40, 0.0
    %162 = vadd.xlane.f32.xlu0 %v161
    %v163 = vpop.xlane.xlu0 %162
    %v164 = vsel %vm76, %v41, 0.0
    %165 = vadd.xlane.f32.xlu0 %v164
    %v166 = vpop.xlane.xlu0 %165
    %v167 = vsel %vm76, %v42, 0.0
    %168 = vadd.xlane.f32.xlu0 %v167
    %v169 = vpop.xlane.xlu0 %168
    %v170 = vsel %vm76, %v43, 0.0
    %171 = vadd.xlane.f32.xlu0 %v170
    %v172 = vpop.xlane.xlu0 %171
    %v173 = vsel %vm76, %v44, 0.0
    %174 = vadd.xlane.f32.xlu0 %v173
    %v175 = vpop.xlane.xlu0 %174
    %v176 = vsel %vm76, %v45, 0.0
    %177 = vadd.xlane.f32.xlu0 %v176
    %v178 = vpop.xlane.xlu0 %177
    %v179 = vsel %vm76, %v46, 0.0
    %180 = vadd.xlane.f32.xlu0 %v179
    %v181 = vpop.xlane.xlu0 %180
    %v182 = vsel %vm76, %v47, 0.0
    %183 = vadd.xlane.f32.xlu0 %v182
    %v184 = vpop.xlane.xlu0 %183
    %v185 = vsel %vm76, %v48, 0.0
    %186 = vadd.xlane.f32.xlu0 %v185
    %v187 = vpop.xlane.xlu0 %186
    %v188 = vsel %vm76, %v49, 0.0
    %189 = vadd.xlane.f32.xlu0 %v188
    %v190 = vpop.xlane.xlu0 %189
    %v191 = vsel %vm76, %v50, 0.0
    %192 = vadd.xlane.f32.xlu0 %v191
    %v193 = vpop.xlane.xlu0 %192
    %v194 = vsel %vm76, %v51, 0.0
    %195 = vadd.xlane.f32.xlu0 %v194
    %v196 = vpop.xlane.xlu0 %195
    %v197 = vsel %vm76, %v52, 0.0
    %198 = vadd.xlane.f32.xlu0 %v197
    %v199 = vpop.xlane.xlu0 %198
    %v200 = vsel %vm76, %v53, 0.0
    %201 = vadd.xlane.f32.xlu0 %v200
    %v202 = vpop.xlane.xlu0 %201
    %v203 = vsel %vm76, %v54, 0.0
    %204 = vadd.xlane.f32.xlu0 %v203
    %v205 = vpop.xlane.xlu0 %204
    %v206 = vsel %vm76, %v55, 0.0
    %207 = vadd.xlane.f32.xlu0 %v206
    %v208 = vpop.xlane.xlu0 %207
    %v209 = vsel %vm76, %v56, 0.0
    %210 = vadd.xlane.f32.xlu0 %v209
    %v211 = vpop.xlane.xlu0 %210
    %v212 = vsel %vm76, %v57, 0.0
    %213 = vadd.xlane.f32.xlu0 %v212
    %v214 = vpop.xlane.xlu0 %213
    %v215 = vsel %vm76, %v58, 0.0
    %216 = vadd.xlane.f32.xlu0 %v215
    %v217 = vpop.xlane.xlu0 %216
    %v218 = vsel %vm76, %v59, 0.0
    %219 = vadd.xlane.f32.xlu0 %v218
    %v220 = vpop.xlane.xlu0 %219
    %v221 = vsel %vm76, %v60, 0.0
    %222 = vadd.xlane.f32.xlu0 %v221
    %v223 = vpop.xlane.xlu0 %222
    %v224 = vsel %vm76, %v61, 0.0
    %225 = vadd.xlane.f32.xlu0 %v224
    %v226 = vpop.xlane.xlu0 %225
    %v227 = vsel %vm76, %v62, 0.0
    %228 = vadd.xlane.f32.xlu0 %v227
    %v229 = vpop.xlane.xlu0 %228
    %v230 = vsel %vm76, %v63, 0.0
    %231 = vadd.xlane.f32.xlu0 %v230
    %v232 = vpop.xlane.xlu0 %231
    %v233 = vsel %vm76, %v64, 0.0
    %234 = vadd.xlane.f32.xlu0 %v233
    %v235 = vpop.xlane.xlu0 %234
    %v236 = vsel %vm76, %v65, 0.0
    %237 = vadd.xlane.f32.xlu0 %v236
    %v238 = vpop.xlane.xlu0 %237
    %v239 = vsel %vm76, %v66, 0.0
    %240 = vadd.xlane.f32.xlu0 %v239
    %v241 = vpop.xlane.xlu0 %240
    %v242 = vsel %vm76, %v67, 0.0
    %243 = vadd.xlane.f32.xlu0 %v242
    %v244 = vpop.xlane.xlu0 %243
    %v245 = vsel %vm76, %v68, 0.0
    %246 = vadd.xlane.f32.xlu0 %v245
    %v247 = vpop.xlane.xlu0 %246
    %v248 = vsel %vm76, %v69, 0.0
    %249 = vadd.xlane.f32.xlu0 %v248
    %v250 = vpop.xlane.xlu0 %249
    %v251 = vsel %vm76, %v70, 0.0
    %252 = vadd.xlane.f32.xlu0 %v251
    %v253 = vpop.xlane.xlu0 %252
    %v254 = vsel %vm76, %v71, 0.0
    %255 = vadd.xlane.f32.xlu0 %v254
    %v256 = vpop.xlane.xlu0 %255
    %v257 = vsel %vm76, %v72, 0.0
    %258 = vadd.xlane.f32.xlu0 %v257
    %v259 = vpop.xlane.xlu0 %258
    %v260 = vsel %vm76, %v73, 0.0
    %261 = vadd.xlane.f32.xlu0 %v260
    %v262 = vpop.xlane.xlu0 %261
    %v263 = vsel %vm76, %v74, 0.0
    %264 = vadd.xlane.f32.xlu0 %v263
    %v265 = vpop.xlane.xlu0 %264
    %v266 = vsel %vm76, %v75, 0.0
    %267 = vadd.xlane.f32.xlu0 %v266
    %v268 = vpop.xlane.xlu0 %267
    %v269 = vld [vmem:[%s1] sm:$0xff]
    %v270 = vld [vmem:[%s1 + $0x8] sm:$0xff]
    %v271 = vld [vmem:[%s1 + $0x10] sm:$0xff]
    %v272 = vld [vmem:[%s1 + $0x18] sm:$0xff]
    %v273 = vld [vmem:[%s1 + $0x20] sm:$0xff]
    %v274 = vld [vmem:[%s1 + $0x28] sm:$0xff]
    %v275 = vld [vmem:[%s1 + $0x30] sm:$0xff]
    %v276 = vld [vmem:[%s1 + $0x38] sm:$0xff]
    %v277 = vld [vmem:[%s1 + $0x40] sm:$0xff]
    %v278 = vld [vmem:[%s1 + $0x48] sm:$0xff]
    %v279 = vld [vmem:[%s1 + $0x50] sm:$0xff]
    %v280 = vld [vmem:[%s1 + $0x58] sm:$0xff]
    %v281 = vld [vmem:[%s1 + $0x60] sm:$0xff]
    %v282 = vld [vmem:[%s1 + $0x68] sm:$0xff]
    %v283 = vld [vmem:[%s1 + $0x70] sm:$0xff]
    %v284 = vld [vmem:[%s1 + $0x78] sm:$0xff]
    %v285 = vld [vmem:[%s1 + $0x80] sm:$0xff]
    %v286 = vld [vmem:[%s1 + $0x88] sm:$0xff]
    %v287 = vld [vmem:[%s1 + $0x90] sm:$0xff]
    %v288 = vld [vmem:[%s1 + $0x98] sm:$0xff]
    %v289 = vld [vmem:[%s1 + $0xa0] sm:$0xff]
    %v290 = vld [vmem:[%s1 + $0xa8] sm:$0xff]
    %v291 = vld [vmem:[%s1 + $0xb0] sm:$0xff]
    %v292 = vld [vmem:[%s1 + $0xb8] sm:$0xff]
    %v293 = vld [vmem:[%s1 + $0xc0] sm:$0xff]
    %v294 = vld [vmem:[%s1 + $0xc8] sm:$0xff]
    %v295 = vld [vmem:[%s1 + $0xd0] sm:$0xff]
    %v296 = vld [vmem:[%s1 + $0xd8] sm:$0xff]
    %v297 = vld [vmem:[%s1 + $0xe0] sm:$0xff]
    %v298 = vld [vmem:[%s1 + $0xe8] sm:$0xff]
    %v299 = vld [vmem:[%s1 + $0xf0] sm:$0xff]
    %v300 = vld [vmem:[%s1 + $0xf8] sm:$0xff]
    %v365 = vlaneseq
    %v366 = vand.u32 %v365, 127
    %v367 = vlaneseq
    %v368 = vshrl.u32 %v367, 7
    %v369 = vsub.s32 %v366, %v368
    %v370 = vrot.slane %v79, %v369
    %v371 = vadd.s32 %v366, 4294967288
    %v372 = vlaneseq
    %v373 = vshrl.u32 %v372, 7
    %v374 = vsub.s32 %v371, %v373
    %v375 = vrot.slane %v82, %v374
    %vm376 = vcmask 130112
    %v377 = vsel %vm376, %v375, %v370
    %v378 = vadd.s32 %v366, 4294967280
    %v379 = vlaneseq
    %v380 = vshrl.u32 %v379, 7
    %v381 = vsub.s32 %v378, %v380
    %v382 = vrot.slane %v85, %v381
    %vm383 = vcmask 195712
    %v384 = vsel %vm383, %v382, %v377
    %v385 = vadd.s32 %v366, 4294967272
    %v386 = vlaneseq
    %v387 = vshrl.u32 %v386, 7
    %v388 = vsub.s32 %v385, %v387
    %v389 = vrot.slane %v88, %v388
    %vm390 = vcmask 261312
    %v391 = vsel %vm390, %v389, %v384
    %v392 = vadd.s32 %v366, 4294967264
    %v393 = vlaneseq
    %v394 = vshrl.u32 %v393, 7
    %v395 = vsub.s32 %v392, %v394
    %v396 = vrot.slane %v91, %v395
    %vm397 = vcmask 326912
    %v398 = vsel %vm397, %v396, %v391
    %v399 = vadd.s32 %v366, 4294967256
    %v400 = vlaneseq
    %v401 = vshrl.u32 %v400, 7
    %v402 = vsub.s32 %v399, %v401
    %v403 = vrot.slane %v94, %v402
    %vm404 = vcmask 392512
    %v405 = vsel %vm404, %v403, %v398
    %v406 = vadd.s32 %v366, 4294967248
    %v407 = vlaneseq
    %v408 = vshrl.u32 %v407, 7
    %v409 = vsub.s32 %v406, %v408
    %v410 = vrot.slane %v97, %v409
    %vm411 = vcmask 458112
    %v412 = vsel %vm411, %v410, %v405
    %v413 = vadd.s32 %v366, 4294967240
    %v414 = vlaneseq
    %v415 = vshrl.u32 %v414, 7
    %v416 = vsub.s32 %v413, %v415
    %v417 = vrot.slane %v100, %v416
    %vm418 = vcmask 523712
    %v419 = vsel %vm418, %v417, %v412
    %v420 = vadd.s32 %v366, 4294967232
    %v421 = vlaneseq
    %v422 = vshrl.u32 %v421, 7
    %v423 = vsub.s32 %v420, %v422
    %v424 = vrot.slane %v103, %v423
    %vm425 = vcmask 589312
    %v426 = vsel %vm425, %v424, %v419
    %v427 = vadd.s32 %v366, 4294967224
    %v428 = vlaneseq
    %v429 = vshrl.u32 %v428, 7
    %v430 = vsub.s32 %v427, %v429
    %v431 = vrot.slane %v106, %v430
    %vm432 = vcmask 654912
    %v433 = vsel %vm432, %v431, %v426
    %v434 = vadd.s32 %v366, 4294967216
    %v435 = vlaneseq
    %v436 = vshrl.u32 %v435, 7
    %v437 = vsub.s32 %v434, %v436
    %v438 = vrot.slane %v109, %v437
    %vm439 = vcmask 720512
    %v440 = vsel %vm439, %v438, %v433
    %v441 = vadd.s32 %v366, 4294967208
    %v442 = vlaneseq
    %v443 = vshrl.u32 %v442, 7
    %v444 = vsub.s32 %v441, %v443
    %v445 = vrot.slane %v112, %v444
    %vm446 = vcmask 786112
    %v447 = vsel %vm446, %v445, %v440
    %v448 = vadd.s32 %v366, 4294967200
    %v449 = vlaneseq
    %v450 = vshrl.u32 %v449, 7
    %v451 = vsub.s32 %v448, %v450
    %v452 = vrot.slane %v115, %v451
    %vm453 = vcmask 851712
    %v454 = vsel %vm453, %v452, %v447
    %v455 = vadd.s32 %v366, 4294967192
    %v456 = vlaneseq
    %v457 = vshrl.u32 %v456, 7
    %v458 = vsub.s32 %v455, %v457
    %v459 = vrot.slane %v118, %v458
    %vm460 = vcmask 917312
    %v461 = vsel %vm460, %v459, %v454
    %v462 = vadd.s32 %v366, 4294967184
    %v463 = vlaneseq
    %v464 = vshrl.u32 %v463, 7
    %v465 = vsub.s32 %v462, %v464
    %v466 = vrot.slane %v121, %v465
    %vm467 = vcmask 982912
    %v468 = vsel %vm467, %v466, %v461
    %v469 = vadd.s32 %v366, 4294967176
    %v470 = vlaneseq
    %v471 = vshrl.u32 %v470, 7
    %v472 = vsub.s32 %v469, %v471
    %v473 = vrot.slane %v124, %v472
    %vm474 = vcmask 1048512
    %v475 = vsel %vm474, %v473, %v468
    %v476 = vlaneseq
    %v477 = vshrl.u32 %v476, 7
    %v478 = vsub.s32 %v366, %v477
    %v479 = vrot.slane %v127, %v478
    %v480 = vlaneseq
    %v481 = vshrl.u32 %v480, 7
    %v482 = vsub.s32 %v371, %v481
    %v483 = vrot.slane %v130, %v482
    %v484 = vsel %vm376, %v483, %v479
    %v485 = vlaneseq
    %v486 = vshrl.u32 %v485, 7
    %v487 = vsub.s32 %v378, %v486
    %v488 = vrot.slane %v133, %v487
    %v489 = vsel %vm383, %v488, %v484
    %v490 = vlaneseq
    %v491 = vshrl.u32 %v490, 7
    %v492 = vsub.s32 %v385, %v491
    %v493 = vrot.slane %v136, %v492
    %v494 = vsel %vm390, %v493, %v489
    %v495 = vlaneseq
    %v496 = vshrl.u32 %v495, 7
    %v497 = vsub.s32 %v392, %v496
    %v498 = vrot.slane %v139, %v497
    %v499 = vsel %vm397, %v498, %v494
    %v500 = vlaneseq
    %v501 = vshrl.u32 %v500, 7
    %v502 = vsub.s32 %v399, %v501
    %v503 = vrot.slane %v142, %v502
    %v504 = vsel %vm404, %v503, %v499
    %v505 = vlaneseq
    %v506 = vshrl.u32 %v505, 7
    %v507 = vsub.s32 %v406, %v506
    %v508 = vrot.slane %v145, %v507
    %v509 = vsel %vm411, %v508, %v504
    %v510 = vlaneseq
    %v511 = vshrl.u32 %v510, 7
    %v512 = vsub.s32 %v413, %v511
    %v513 = vrot.slane %v148, %v512
    %v514 = vsel %vm418, %v513, %v509
    %v515 = vlaneseq
    %v516 = vshrl.u32 %v515, 7
    %v517 = vsub.s32 %v420, %v516
    %v518 = vrot.slane %v151, %v517
    %v519 = vsel %vm425, %v518, %v514
    %v520 = vlaneseq
    %v521 = vshrl.u32 %v520, 7
    %v522 = vsub.s32 %v427, %v521
    %v523 = vrot.slane %v154, %v522
    %v524 = vsel %vm432, %v523, %v519
    %v525 = vlaneseq
    %v526 = vshrl.u32 %v525, 7
    %v527 = vsub.s32 %v434, %v526
    %v528 = vrot.slane %v157, %v527
    %v529 = vsel %vm439, %v528, %v524
    %v530 = vlaneseq
    %v531 = vshrl.u32 %v530, 7
    %v532 = vsub.s32 %v441, %v531
    %v533 = vrot.slane %v160, %v532
    %v534 = vsel %vm446, %v533, %v529
    %v535 = vlaneseq
    %v536 = vshrl.u32 %v535, 7
    %v537 = vsub.s32 %v448, %v536
    %v538 = vrot.slane %v163, %v537
    %v539 = vsel %vm453, %v538, %v534
    %v540 = vlaneseq
    %v541 = vshrl.u32 %v540, 7
    %v542 = vsub.s32 %v455, %v541
    %v543 = vrot.slane %v166, %v542
    %v544 = vsel %vm460, %v543, %v539
    %v545 = vlaneseq
    %v546 = vshrl.u32 %v545, 7
    %v547 = vsub.s32 %v462, %v546
    %v548 = vrot.slane %v169, %v547
    %v549 = vsel %vm467, %v548, %v544
    %v550 = vlaneseq
    %v551 = vshrl.u32 %v550, 7
    %v552 = vsub.s32 %v469, %v551
    %v553 = vrot.slane %v172, %v552
    %v554 = vsel %vm474, %v553, %v549
    %v555 = vlaneseq
    %v556 = vshrl.u32 %v555, 7
    %v557 = vsub.s32 %v366, %v556
    %v558 = vrot.slane %v175, %v557
    %v559 = vlaneseq
    %v560 = vshrl.u32 %v559, 7
    %v561 = vsub.s32 %v371, %v560
    %v562 = vrot.slane %v178, %v561
    %v563 = vsel %vm376, %v562, %v558
    %v564 = vlaneseq
    %v565 = vshrl.u32 %v564, 7
    %v566 = vsub.s32 %v378, %v565
    %v567 = vrot.slane %v181, %v566
    %v568 = vsel %vm383, %v567, %v563
    %v569 = vlaneseq
    %v570 = vshrl.u32 %v569, 7
    %v571 = vsub.s32 %v385, %v570
    %v572 = vrot.slane %v184, %v571
    %v573 = vsel %vm390, %v572, %v568
    %v574 = vlaneseq
    %v575 = vshrl.u32 %v574, 7
    %v576 = vsub.s32 %v392, %v575
    %v577 = vrot.slane %v187, %v576
    %v578 = vsel %vm397, %v577, %v573
    %v579 = vlaneseq
    %v580 = vshrl.u32 %v579, 7
    %v581 = vsub.s32 %v399, %v580
    %v582 = vrot.slane %v190, %v581
    %v583 = vsel %vm404, %v582, %v578
    %v584 = vlaneseq
    %v585 = vshrl.u32 %v584, 7
    %v586 = vsub.s32 %v406, %v585
    %v587 = vrot.slane %v193, %v586
    %v588 = vsel %vm411, %v587, %v583
    %v589 = vlaneseq
    %v590 = vshrl.u32 %v589, 7
    %v591 = vsub.s32 %v413, %v590
    %v592 = vrot.slane %v196, %v591
    %v593 = vsel %vm418, %v592, %v588
    %v594 = vlaneseq
    %v595 = vshrl.u32 %v594, 7
    %v596 = vsub.s32 %v420, %v595
    %v597 = vrot.slane %v199, %v596
    %v598 = vsel %vm425, %v597, %v593
    %v599 = vlaneseq
    %v600 = vshrl.u32 %v599, 7
    %v601 = vsub.s32 %v427, %v600
    %v602 = vrot.slane %v202, %v601
    %v603 = vsel %vm432, %v602, %v598
    %v604 = vlaneseq
    %v605 = vshrl.u32 %v604, 7
    %v606 = vsub.s32 %v434, %v605
    %v607 = vrot.slane %v205, %v606
    %v608 = vsel %vm439, %v607, %v603
    %v609 = vlaneseq
    %v610 = vshrl.u32 %v609, 7
    %v611 = vsub.s32 %v441, %v610
    %v612 = vrot.slane %v208, %v611
    %v613 = vsel %vm446, %v612, %v608
    %v614 = vlaneseq
    %v615 = vshrl.u32 %v614, 7
    %v616 = vsub.s32 %v448, %v615
    %v617 = vrot.slane %v211, %v616
    %v618 = vsel %vm453, %v617, %v613
    %v619 = vlaneseq
    %v620 = vshrl.u32 %v619, 7
    %v621 = vsub.s32 %v455, %v620
    %v622 = vrot.slane %v214, %v621
    %v623 = vsel %vm460, %v622, %v618
    %v624 = vlaneseq
    %v625 = vshrl.u32 %v624, 7
    %v626 = vsub.s32 %v462, %v625
    %v627 = vrot.slane %v217, %v626
    %v628 = vsel %vm467, %v627, %v623
    %v629 = vlaneseq
    %v630 = vshrl.u32 %v629, 7
    %v631 = vsub.s32 %v469, %v630
    %v632 = vrot.slane %v220, %v631
    %v633 = vsel %vm474, %v632, %v628
    %v634 = vlaneseq
    %v635 = vshrl.u32 %v634, 7
    %v636 = vsub.s32 %v366, %v635
    %v637 = vrot.slane %v223, %v636
    %v638 = vlaneseq
    %v639 = vshrl.u32 %v638, 7
    %v640 = vsub.s32 %v371, %v639
    %v641 = vrot.slane %v226, %v640
    %v642 = vsel %vm376, %v641, %v637
    %v643 = vlaneseq
    %v644 = vshrl.u32 %v643, 7
    %v645 = vsub.s32 %v378, %v644
    %v646 = vrot.slane %v229, %v645
    %v647 = vsel %vm383, %v646, %v642
    %v648 = vlaneseq
    %v649 = vshrl.u32 %v648, 7
    %v650 = vsub.s32 %v385, %v649
    %v651 = vrot.slane %v232, %v650
    %v652 = vsel %vm390, %v651, %v647
    %v653 = vlaneseq
    %v654 = vshrl.u32 %v653, 7
    %v655 = vsub.s32 %v392, %v654
    %v656 = vrot.slane %v235, %v655
    %v657 = vsel %vm397, %v656, %v652
    %v658 = vlaneseq
    %v659 = vshrl.u32 %v658, 7
    %v660 = vsub.s32 %v399, %v659
    %v661 = vrot.slane %v238, %v660
    %v662 = vsel %vm404, %v661, %v657
    %v663 = vlaneseq
    %v664 = vshrl.u32 %v663, 7
    %v665 = vsub.s32 %v406, %v664
    %v666 = vrot.slane %v241, %v665
    %v667 = vsel %vm411, %v666, %v662
    %v668 = vlaneseq
    %v669 = vshrl.u32 %v668, 7
    %v670 = vsub.s32 %v413, %v669
    %v671 = vrot.slane %v244, %v670
    %v672 = vsel %vm418, %v671, %v667
    %v673 = vlaneseq
    %v674 = vshrl.u32 %v673, 7
    %v675 = vsub.s32 %v420, %v674
    %v676 = vrot.slane %v247, %v675
    %v677 = vsel %vm425, %v676, %v672
    %v678 = vlaneseq
    %v679 = vshrl.u32 %v678, 7
    %v680 = vsub.s32 %v427, %v679
    %v681 = vrot.slane %v250, %v680
    %v682 = vsel %vm432, %v681, %v677
    %v683 = vlaneseq
    %v684 = vshrl.u32 %v683, 7
    %v685 = vsub.s32 %v434, %v684
    %v686 = vrot.slane %v253, %v685
    %v687 = vsel %vm439, %v686, %v682
    %v688 = vlaneseq
    %v689 = vshrl.u32 %v688, 7
    %v690 = vsub.s32 %v441, %v689
    %v691 = vrot.slane %v256, %v690
    %v692 = vsel %vm446, %v691, %v687
    %v693 = vlaneseq
    %v694 = vshrl.u32 %v693, 7
    %v695 = vsub.s32 %v448, %v694
    %v696 = vrot.slane %v259, %v695
    %v697 = vsel %vm453, %v696, %v692
    %v698 = vlaneseq
    %v699 = vshrl.u32 %v698, 7
    %v700 = vsub.s32 %v455, %v699
    %v701 = vrot.slane %v262, %v700
    %v702 = vsel %vm460, %v701, %v697
    %v703 = vlaneseq
    %v704 = vshrl.u32 %v703, 7
    %v705 = vsub.s32 %v462, %v704
    %v706 = vrot.slane %v265, %v705
    %v707 = vsel %vm467, %v706, %v702
    %v708 = vlaneseq
    %v709 = vshrl.u32 %v708, 7
    %v710 = vsub.s32 %v469, %v709
    %v711 = vrot.slane %v268, %v710
    %v712 = vsel %vm474, %v711, %v707
    %vm713 = vcmask 1041409
    %v714 = vsel %vm713, %v633, %v475
    %v715 = vsel %vm713, %v712, %v554
    %718 = vmatprep.subr.mxu0 0.0
    %719 = vmatpush1.msra.mxu0 %v269
    %720 = vmatprep.subr.mxu0 0.0
    %721 = vmatpush1.msra.mxu0 %v270
    %722 = vmatprep.subr.mxu0 0.0
    %723 = vmatpush1.msra.mxu0 %v271
    %724 = vmatprep.subr.mxu0 0.0
    %725 = vmatpush1.msra.mxu0 %v272
    %726 = vmatprep.subr.mxu0 0.0
    %727 = vmatpush1.msra.mxu0 %v273
    %728 = vmatprep.subr.mxu0 0.0
    %729 = vmatpush1.msra.mxu0 %v274
    %730 = vmatprep.subr.mxu0 0.0
    %731 = vmatpush1.msra.mxu0 %v275
    %732 = vmatprep.subr.mxu0 0.0
    %733 = vmatpush1.msra.mxu0 %v276
    %734 = vmatprep.subr.mxu0 0.0
    %735 = vmatpush1.msra.mxu0 %v277
    %736 = vmatprep.subr.mxu0 0.0
    %737 = vmatpush1.msra.mxu0 %v278
    %738 = vmatprep.subr.mxu0 0.0
    %739 = vmatpush1.msra.mxu0 %v279
    %740 = vmatprep.subr.mxu0 0.0
    %741 = vmatpush1.msra.mxu0 %v280
    %742 = vmatprep.subr.mxu0 0.0
    %743 = vmatpush1.msra.mxu0 %v281
    %744 = vmatprep.subr.mxu0 0.0
    %745 = vmatpush1.msra.mxu0 %v282
    %746 = vmatprep.subr.mxu0 0.0
    %747 = vmatpush1.msra.mxu0 %v283
    %748 = vmatprep.subr.mxu0 0.0
    %749 = vmatpush1.msra.mxu0 %v284
    %750 = vmatprep.subr.mxu0 0.0
    %751 = vmatpush1.msra.mxu0 %v285
    %752 = vmatprep.subr.mxu0 0.0
    %753 = vmatpush1.msra.mxu0 %v286
    %754 = vmatprep.subr.mxu0 0.0
    %755 = vmatpush1.msra.mxu0 %v287
    %756 = vmatprep.subr.mxu0 0.0
    %757 = vmatpush1.msra.mxu0 %v288
    %758 = vmatprep.subr.mxu0 0.0
    %759 = vmatpush1.msra.mxu0 %v289
    %760 = vmatprep.subr.mxu0 0.0
    %761 = vmatpush1.msra.mxu0 %v290
    %762 = vmatprep.subr.mxu0 0.0
    %763 = vmatpush1.msra.mxu0 %v291
    %764 = vmatprep.subr.mxu0 0.0
    %765 = vmatpush1.msra.mxu0 %v292
    %766 = vmatprep.subr.mxu0 0.0
    %767 = vmatpush1.msra.mxu0 %v293
    %768 = vmatprep.subr.mxu0 0.0
    %769 = vmatpush1.msra.mxu0 %v294
    %770 = vmatprep.subr.mxu0 0.0
    %771 = vmatpush1.msra.mxu0 %v295
    %772 = vmatprep.subr.mxu0 0.0
    %773 = vmatpush1.msra.mxu0 %v296
    %774 = vmatprep.subr.mxu0 0.0
    %775 = vmatpush1.msra.mxu0 %v297
    %776 = vmatprep.subr.mxu0 0.0
    %777 = vmatpush1.msra.mxu0 %v298
    %778 = vmatprep.subr.mxu0 0.0
    %779 = vmatpush1.msra.mxu0 %v299
    %780 = vmatprep.subr.mxu0 0.0
    %781 = vmatpush1.msra.mxu0 %v300
    %782 = vmatprep.mubr.f32.mxu0 %v715
    %783 = vmatmul.mubr.f32.gmra.mrb[0].mxu0 %v714
    %v784 = vpop.f32.mrb[0].mxu0
    %v785 = vadd.f32 0.0, %v784
    %v786 = vpop.f32.mrb[0].mxu0
    %787 = vdwg.mxu0
    %788 = vst [vmem:[#allocation2] sm:$0x3] %v785
    // Predicated region
    $region10: #{tpu_custom_call.1} parent=1 // pred_check
      _
    $region11: #{tpu_custom_call.1} parent=1 // pred_check_branch
      %790 = sbr.rel (0) target = $region13
    $region12: #{tpu_custom_call.1} parent=1 // pred_region
      %s792 = ssub.s32 32, 32
      %793 = vsyncadd [#allocation3], %s792
      %s795 = sshll.u32 [#allocation2], 4
      %s796 = int_to_ptr.vmem [resolvable:$true] %s795
      %798 = dma.vmem_to_hbm [thread:$0]  %s796, 32, %s2, [#allocation3]
    $region13: #{tpu_custom_call.1} parent=1 // pred_fallthru
      _
    // Predicated region
    $region14: #{tpu_custom_call.1} parent=1 // pred_check
      _
    $region15: #{tpu_custom_call.1} parent=1 // pred_check_branch
      %800 = sbr.rel (0) target = $region17
    $region16: #{tpu_custom_call.1} parent=1 // pred_region
      %801 = dma.done [#allocation3], 32
    $region17: #{tpu_custom_call.1} parent=1 // pred_fallthru
      _
    %802 = vsyncpa [#allocation3], 1

</llo_original>
